<compile_context>
chip_gen: v6e
topology: v6e:2x2x1
jax: 0.10.0
libtpu: 0.0.40
codegen_flags: <defaults>
</compile_context>

<pallas_src>
import jax
import jax.numpy as jnp
from jax.experimental import pallas as pl
from jax.experimental.pallas import tpu as pltpu


def embed_gather_kernel(ids_ref, table_ref, out_ref, copy_sem):
    """Gather `tile` embedding rows from the HBM-resident table via DMA.

    ids_ref:   (Tp,)      int32 in SMEM (scalar-prefetched, clamped token ids)
    table_ref: (V, Dp)    table in HBM (memory_space=pl.ANY); never copied whole
    out_ref:   (tile, Dp) VMEM output block for this grid step
    copy_sem:  (1,)       DMA semaphore shared by all row copies of this step
    """
    tile = out_ref.shape[0]
    base = pl.program_id(0) * tile

    def issue(t, carry):
        tok = ids_ref[base + t]
        pltpu.make_async_copy(
            table_ref.at[pl.ds(tok, 1), :],
            out_ref.at[pl.ds(t, 1), :],
            copy_sem.at[0],
        ).start()
        return carry

    # Issue all row DMAs first so they overlap with each other.
    jax.lax.fori_loop(0, tile, issue, 0)

    def drain(t, carry):
        # Every copy has the same size, so waiting `tile` times on the shared
        # semaphore completes exactly when all row DMAs have landed.
        pltpu.make_async_copy(
            table_ref.at[pl.ds(0, 1), :],
            out_ref.at[pl.ds(t, 1), :],
            copy_sem.at[0],
        ).wait()
        return carry

    jax.lax.fori_loop(0, tile, drain, 0)


def nn_embedder_forward(x, table, *, tile=256):
    """x: (B, S) integer token ids; table: (V, D) float. Returns (B, S, D)."""
    B, S = x.shape
    V, D = table.shape
    T = B * S

    # Lane-dense output: pad the embedding dim up to a multiple of 128.
    Dp = pl.cdiv(D, 128) * 128
    table_p = table if Dp == D else jnp.pad(table, ((0, 0), (0, Dp - D)))

    # Large token tile (multiple of 8 sublanes), but don't over-pad tiny inputs.
    tile = max(8, min(tile, pl.cdiv(T, 8) * 8))
    Tp = pl.cdiv(T, tile) * tile

    # Clamp ids to the valid range (PyTorch raises for OOB ids; we clamp so the
    # DMA source index is always in bounds).  Padded slots gather row 0 and are
    # sliced off below.
    # TODO(synk): ids live in SMEM for the whole call; for very large B*S,
    # tile the id stream as well instead of prefetching it all at once.
    ids = jnp.clip(x.reshape(T).astype(jnp.int32), 0, V - 1)
    if Tp != T:
        ids = jnp.pad(ids, (0, Tp - T))

    itemsize = jnp.dtype(table.dtype).itemsize
    cost = pl.CostEstimate(
        flops=0,
        transcendentals=0,
        # gathered rows read + output written + id stream
        bytes_accessed=2 * Tp * Dp * itemsize + Tp * 4,
    )

    out = pl.pallas_call(
        embed_gather_kernel,
        out_shape=jax.ShapeDtypeStruct((Tp, Dp), table.dtype),
        grid_spec=pltpu.PrefetchScalarGridSpec(
            num_scalar_prefetch=1,                          # ids -> SMEM
            grid=(Tp // tile,),
            in_specs=[pl.BlockSpec(memory_space=pl.ANY)],   # table stays in HBM
            out_specs=pl.BlockSpec((tile, Dp), lambda i, ids_smem: (i, 0)),
            scratch_shapes=[pltpu.SemaphoreType.DMA((1,))],
        ),
        compiler_params=pltpu.CompilerParams(
            # Token axis is embarrassingly parallel -> sharded across the two
            # TensorCores on v7x; near-neutral (and harmless) on v5e/v6e.
            dimension_semantics=("parallel",),
        ),
        cost_estimate=cost,
    )(ids, table_p)

    return out[:T, :D].reshape(B, S, D)


if __name__ == "__main__":
    # Small shapes consistent with the module: vocab_size=128, embed_dim=32,
    # batch=2, seq=8.
    vocab_size, embed_dim = 128, 32
    B, S = 2, 8

    key = jax.random.PRNGKey(0)
    k_tbl, k_ids = jax.random.split(key)

    # nn.Embedding initializes weights ~ N(0, 1); do the same deterministically.
    table = jax.random.normal(k_tbl, (vocab_size, embed_dim), dtype=jnp.float32)
    x = jax.random.randint(k_ids, (B, S), 0, vocab_size, dtype=jnp.int32)

    out = nn_embedder_forward(x, table)
    out = jax.block_until_ready(out)

    # Reference check against a plain JAX gather (same semantics as torch embed).
    ref = table[x]
    assert out.shape == (B, S, embed_dim)
    assert jnp.allclose(out, ref, atol=1e-6), "mismatch vs reference gather"

    print("KERNEL_OK")
</pallas_src>

<mosaic_0001>
module attributes {stable_mosaic.version = 11 : i64} {
  func.func @embed_gather_kernel(%arg0: i32, %arg1: memref<16xi32, #tpu.memory_space<smem>>, %arg2: memref<128x128xf32, #tpu.memory_space<any>>, %arg3: memref<16x128xf32, #tpu.memory_space<vmem>>, %arg4: memref<1x!tpu.dma_semaphore, #tpu.memory_space<semaphore_mem>>) attributes {dimension_semantics = [#tpu.dimension_semantics<parallel>], iteration_bounds = array<i64: 1>, scalar_prefetch = 1 : i64, scratch_operands = 1 : i64, tpu.core_type = #tpu.core_type<tc>, window_params = [{}, {transform_indices = @transform_1, window_bounds = array<i64: 16, 128>}]} {
    %c16_i32 = arith.constant 16 : i32
    %0 = arith.muli %arg0, %c16_i32 : i32
    %c0_i32 = arith.constant 0 : i32
    %c16_i32_0 = arith.constant 16 : i32
    %1 = arith.addi %c0_i32, %c16_i32_0 : i32
    %c1_i32 = arith.constant 1 : i32
    scf.for %arg5 = %c0_i32 to %1 step %c1_i32  : i32 {
      %3 = arith.addi %0, %arg5 : i32
      %4 = arith.index_cast %3 : i32 to index
      %5 = memref.load %arg1[%4] : memref<16xi32, #tpu.memory_space<smem>>
      %c0_i32_6 = arith.constant 0 : i32
      %c0_i32_7 = arith.constant 0 : i32
      %6 = tpu.memref_slice %arg2[%5, %c0_i32_7] : memref<128x128xf32, #tpu.memory_space<any>> -> memref<1x128xf32, #tpu.memory_space<any>>
      %c0_i32_8 = arith.constant 0 : i32
      %7 = tpu.memref_slice %arg3[%arg5, %c0_i32_8] : memref<16x128xf32, #tpu.memory_space<vmem>> -> memref<1x128xf32, #tpu.memory_space<vmem>>
      %8 = tpu.memref_slice %arg4[%c0_i32_6] : memref<1x!tpu.dma_semaphore, #tpu.memory_space<semaphore_mem>> -> memref<1x!tpu.dma_semaphore, #tpu.memory_space<semaphore_mem>>
      %9 = tpu.memref_squeeze %8 : memref<1x!tpu.dma_semaphore, #tpu.memory_space<semaphore_mem>> -> memref<!tpu.dma_semaphore, #tpu.memory_space<semaphore_mem>>
      tpu.enqueue_dma source(%6 : memref<1x128xf32, #tpu.memory_space<any>>) target(%7 : memref<1x128xf32, #tpu.memory_space<vmem>>) target_semaphore(%9 : memref<!tpu.dma_semaphore, #tpu.memory_space<semaphore_mem>>)
    }
    %c16_i32_1 = arith.constant 16 : i32
    %c0_i32_2 = arith.constant 0 : i32
    %c16_i32_3 = arith.constant 16 : i32
    %2 = arith.addi %c0_i32_2, %c16_i32_3 : i32
    %c1_i32_4 = arith.constant 1 : i32
    scf.for %arg5 = %c0_i32_2 to %2 step %c1_i32_4  : i32 {
      %c0_i32_6 = arith.constant 0 : i32
      %c0_i32_7 = arith.constant 0 : i32
      %c0_i32_8 = arith.constant 0 : i32
      %3 = tpu.memref_slice %arg2[%c0_i32_7, %c0_i32_8] : memref<128x128xf32, #tpu.memory_space<any>> -> memref<1x128xf32, #tpu.memory_space<any>>
      %c0_i32_9 = arith.constant 0 : i32
      %4 = tpu.memref_slice %arg3[%arg5, %c0_i32_9] : memref<16x128xf32, #tpu.memory_space<vmem>> -> memref<1x128xf32, #tpu.memory_space<vmem>>
      %5 = tpu.memref_slice %arg4[%c0_i32_6] : memref<1x!tpu.dma_semaphore, #tpu.memory_space<semaphore_mem>> -> memref<1x!tpu.dma_semaphore, #tpu.memory_space<semaphore_mem>>
      %6 = tpu.memref_squeeze %5 : memref<1x!tpu.dma_semaphore, #tpu.memory_space<semaphore_mem>> -> memref<!tpu.dma_semaphore, #tpu.memory_space<semaphore_mem>>
      tpu.wait_dma2 semaphore(%6 : memref<!tpu.dma_semaphore, #tpu.memory_space<semaphore_mem>>) src(%3 : memref<1x128xf32, #tpu.memory_space<any>>) dst(%4 : memref<1x128xf32, #tpu.memory_space<vmem>>)
    }
    %c16_i32_5 = arith.constant 16 : i32
    return
  }
  func.func @transform_1(%arg0: i32, %arg1: memref<16xi32, #tpu.memory_space<smem>>) -> (i32, i32) {
    %c0_i32 = arith.constant 0 : i32
    %c0_i32_0 = arith.constant 0 : i32
    return %arg0, %c0_i32 : i32, i32
  }
}

</mosaic_0001>

<llo_original>
// kernel: tpu_custom_call.1
$region0: #{tpu_custom_call.1}
  #allocation0 [shape = 'u32[]', space=smem, size = 0x4, offset = 0x4, fixed_abs, tag = 'smem constant byte address 0x4 - core index']
  #allocation1 [shape = 'u32[144,128]{1,0:T(1,128)}', space=vmem, size = 0x12000, scoped, tag = 'internal scratch']
  #allocation2 [shape = 's32[1]{0}', space=sflag, size = 0x4, scoped, tag = 'scratch operand']
  #allocation3 [shape = 's32[1]{0}', space=sflag, size = 0x4, scoped, tag = 'scoped memory for tpu_custom_call.1']
  #allocation4 [shape = 'u8[512]{0}', space=smem, size = 0x200, scoped, tag = 'prefetched SMEM operand 0']
  #allocation7 [shape = 's32[]', space=sflag, size = 0x4, offset = 0, fixed_abs, tag = 'sflag constant byte address 0x0 - dummy sync flag']
  #allocation8 [shape = 's32[]', space=sflag, size = 0x4, offset = 0, fixed_abs, tag = 'sflag constant byte address 0x0 - dummy sync flag']
  #allocation9 [shape = 'u32[]', space=smem, size = 0x4, offset = 0x44, fixed_abs, tag = 'smem constant byte address 0x44 - assertion arg 0']
  #allocation10 [shape = 'u32[]', space=smem, size = 0x4, offset = 0x48, fixed_abs, tag = 'smem constant byte address 0x48 - assertion arg 1']
  %s0 = inlined_call_operand.hbm [shape: s32[16], index: 0, kind: input, shape index: {}]
  %s1 = inlined_call_operand.hbm [shape: f32[128,128], index: 1, kind: input, shape index: {}]
  %s2 = inlined_call_operand.hbm [shape: f32[16,128], index: 2, kind: output, shape index: {}]
  %s3 = sld [smem:[#allocation0]]
  $region28: #{tpu_custom_call.1} parent=0
    _
  %s5 = ssub.s32 1, %s3
  %s6 = scalar_select 0, %s5, %s3
  %8 = dma.hbm_to_smem %s0, 16, [#allocation4], [#allocation3]
  %9 = dma.done [#allocation3], 16
  %10 = sfence
  $region1: #{tpu_custom_call.1} parent=0
    #allocation5 [shape = 'u8[8192]{0}', space=vmem, size = 0x2000, scoped, tag = 'output window, operand 0, single buffered']
    #allocation6 [shape = 's32[1]{0}', space=sflag, size = 0x4, scoped, tag = 'scoped memory for tpu_custom_call.1']
    %11 = vsyncpa [#allocation6], 0
    %s12 = smul.u32 0, 16
    loop: start=0, step=1, limit=16
    $region2: #{tpu_custom_call.1} parent=1 // loop_pre_header
      _
    $region3: #{tpu_custom_call.1} parent=1 // loop_header
      %s14 = sphi 0, %s18
      %p15 = scmp.ge.s32.totalorder %s14, 16
    $region4: #{tpu_custom_call.1} parent=1 // loop_header_branch
      %17 = sbr.rel (%p15) target = $region8
    $region5: #{tpu_custom_call.1} parent=1 // loop_body
      %s19 = sadd.s32 %s12, %s14
      %s20 = sld [smem:[#allocation4 + %s19]]
      %s21 = smul.addr %s20, 16
      %s22 = scalar_lea.hbm %s1, %s21
      %s23 = scalar_lea.vmem [#allocation5], %s14
      // Predicated region
      $region9: #{tpu_custom_call.1} parent=5 // pred_check
        _
      $region10: #{tpu_custom_call.1} parent=5 // pred_check_branch
        %25 = sbr.rel target = $region12
      $region11: #{tpu_custom_call.1} parent=5 // pred_region
        %26 = sst [smem:[#allocation9]] [#allocation8]
        %27 = sst [smem:[#allocation10]] [#allocation7]
      $region12: #{tpu_custom_call.1} parent=5 // pred_fallthru
        _
      %29 = shalt.err (0)
      %s31 = sshll.u32 %s23, 4
      %s32 = int_to_ptr.vmem [resolvable:$true] %s31
      %34 = dma.hbm_to_vmem [thread:$0]  %s22, 16, %s32, [#allocation2]
    $region6: #{tpu_custom_call.1} parent=1 // loop_footer
      %s18 = sadd.s32 1, %s14
    $region7: #{tpu_custom_call.1} parent=1 // loop_footer_branch
      %13 = sbr.rel target = $region3
    $region8: #{tpu_custom_call.1} parent=1 // loop_exit
      _
    loop: start=0, step=1, limit=16
    $region13: #{tpu_custom_call.1} parent=1 // loop_pre_header
      _
    $region14: #{tpu_custom_call.1} parent=1 // loop_header
      %s36 = sphi 0, %s40
      %p37 = scmp.ge.s32.totalorder %s36, 16
    $region15: #{tpu_custom_call.1} parent=1 // loop_header_branch
      %39 = sbr.rel (%p37) target = $region19
    $region16: #{tpu_custom_call.1} parent=1 // loop_body
      %s41 = smul.u32 1, 1
      %s42 = sshll.u32 %s41, 4
      %43 = dma.done [#allocation2], %s42
    $region17: #{tpu_custom_call.1} parent=1 // loop_footer
      %s40 = sadd.s32 1, %s36
    $region18: #{tpu_custom_call.1} parent=1 // loop_footer_branch
      %35 = sbr.rel target = $region14
    $region19: #{tpu_custom_call.1} parent=1 // loop_exit
      _
    // Predicated region
    $region20: #{tpu_custom_call.1} parent=1 // pred_check
      _
    $region21: #{tpu_custom_call.1} parent=1 // pred_check_branch
      %45 = sbr.rel (0) target = $region23
    $region22: #{tpu_custom_call.1} parent=1 // pred_region
      %s47 = ssub.s32 256, 256
      %48 = vsyncadd [#allocation6], %s47
      %s49 = sshll.u32 [#allocation5], 4
      %s50 = int_to_ptr.vmem [resolvable:$true] %s49
      %55 = dma.vmem_to_hbm [thread:$0]  %s50, 256, %s2, [#allocation6], 128, 128, 8
    $region23: #{tpu_custom_call.1} parent=1 // pred_fallthru
      _
    // Predicated region
    $region24: #{tpu_custom_call.1} parent=1 // pred_check
      _
    $region25: #{tpu_custom_call.1} parent=1 // pred_check_branch
      %57 = sbr.rel (0) target = $region27
    $region26: #{tpu_custom_call.1} parent=1 // pred_region
      %58 = dma.done [#allocation6], 256
    $region27: #{tpu_custom_call.1} parent=1 // pred_fallthru
      _
    %59 = vsyncpa [#allocation6], 1
  %60 = vsyncmov [#allocation2]
  %s61 = vpop.sfrf %60
  %p62 = scmp.eq.s32.totalorder %s61, 0
  %p63 = pneg %p62
  %65 = shalt.err (%p63)

</llo_original>
